<compile_context>
chip_gen: v6e
topology: v6e:2x2x1
jax: 0.10.0
libtpu: 0.0.40
codegen_flags: <defaults>
</compile_context>

<pallas_src>
import functools

import jax
import jax.numpy as jnp
from jax import lax
from jax.experimental import pallas as pl
from jax.experimental.pallas import tpu as pltpu


def _kmeans_kernel(x_ref, c0_ref, ixs_ref, c_ref, prev_pot_ref, done_ref, *,
                   n_clusters, max_iter, tol):
    """Full Lloyd algorithm (max_iter iterations + tol early stop) in one kernel."""
    n, f = x_ref.shape
    kp = c0_ref.shape[0]

    # ---- loop-invariant setup (runs once; x stays resident in VMEM) ----
    x = x_ref[...]                                                   # (N, F) f32
    ones_row = jnp.ones((1, f), jnp.float32)
    # ||x||^2 in lane-major (1, N) layout via the MXU (no transpose, hoisted).
    x_n = lax.dot_general(ones_row, x * x, (((1,), (1,)), ((), ())),
                          preferred_element_type=jnp.float32)        # (1, N)
    row = lax.broadcasted_iota(jnp.int32, (kp, n), 0)                # cluster id / sublane
    real_cluster = row < n_clusters                                  # mask for pad rows

    # Working centers live directly in the output buffer (written back once at the end).
    c_ref[...] = c0_ref[...]
    prev_pot_ref[...] = jnp.full((1, 1), jnp.inf, jnp.float32)
    done_ref[...] = jnp.zeros((1, 1), jnp.int32)

    @pl.loop(0, max_iter)
    def _lloyd(it):
        del it

        @pl.when(done_ref[0, 0] == 0)                                # real compute skip
        def _active():
            c = c_ref[...]                                           # (KP, F)

            # Squared distances, clusters on sublanes / samples on lanes: (KP, N).
            cx = lax.dot_general(c, x, (((1,), (1,)), ((), ())),
                                 preferred_element_type=jnp.float32)  # (KP, N)
            c_n = jnp.sum(c * c, axis=1, keepdims=True)               # (KP, 1)
            d = jnp.maximum(c_n + x_n - 2.0 * cx, 0.0)                # torch.clamp(min=0)
            # Padded rows and NaN (empty-cluster) centers never win the argmin.
            d = jnp.where(real_cluster & jnp.logical_not(jnp.isnan(d)), d, jnp.inf)

            min_d = jnp.min(d, axis=0, keepdims=True)                 # (1, N)
            # First-occurrence argmin over the (8-sublane) cluster axis.
            ixs = jnp.min(jnp.where(d == min_d, row, kp),
                          axis=0, keepdims=True)                      # (1, N) int32
            ixs_ref[...] = ixs                                        # lane-dense store

            # New centers: one-hot matmul for sums, single-vreg lane reduce for counts.
            onehot = (row == ixs).astype(jnp.float32)                 # (KP, N)
            sums = lax.dot_general(onehot, x, (((1,), (0,)), ((), ())),
                                   preferred_element_type=jnp.float32)  # (KP, F)
            counts = jnp.sum(onehot, axis=1, keepdims=True)           # (KP, 1)
            # Empty cluster -> 0 * inf -> NaN (matches torch's mean of empty slice).
            c_ref[...] = sums * pl.reciprocal(counts, approx=True)

            # Potential + tol-based early stop.
            pot = jnp.sum(min_d, axis=1, keepdims=True)               # (1, 1)
            done_ref[...] = (jnp.abs(pot - prev_pot_ref[...]) < tol).astype(jnp.int32)
            prev_pot_ref[...] = pot


@functools.partial(jax.jit, static_argnames=("n_clusters", "max_iter", "tol"))
def kmeans_forward(x, key, n_clusters=5, max_iter=30, tol=1e-5):
    """Equivalent of KMeans(n_clusters, init='random', n_init=1).forward(x).

    Returns (cluster_ixs[int32, (n_samples,)], cluster_centers[f32, (n_clusters, n_features)]).
    """
    n, f = x.shape
    if n < n_clusters:
        raise ValueError("The number of samples is lower than the number of clusters.")

    x = x.astype(jnp.float32)
    kp = max(8, ((n_clusters + 7) // 8) * 8)          # pad cluster axis once (TPU-friendly)

    # init='random': pick n_clusters distinct samples uniformly without replacement.
    perm = jax.random.permutation(key, n)
    centers0 = x[perm[:n_clusters]]
    c0 = jnp.concatenate(
        [centers0, jnp.zeros((kp - n_clusters, f), jnp.float32)], axis=0)  # zero pad rows

    flops_per_iter = 2 * (2 * kp * n * f) + 12 * kp * n
    cost = pl.CostEstimate(
        flops=max_iter * flops_per_iter + 2 * n * f,
        transcendentals=max_iter * kp,
        bytes_accessed=4 * (n * f + 2 * kp * f) + 4 * n,
    )

    ixs_1n, c_out = pl.pallas_call(
        functools.partial(_kmeans_kernel, n_clusters=n_clusters,
                          max_iter=max_iter, tol=float(tol)),
        out_shape=(
            jax.ShapeDtypeStruct((1, n), jnp.int32),     # assignments, lane-dense
            jax.ShapeDtypeStruct((kp, f), jnp.float32),  # padded centers
        ),
        in_specs=[
            pl.BlockSpec((n, f), lambda: (0, 0)),
            pl.BlockSpec((kp, f), lambda: (0, 0)),
        ],
        out_specs=(
            pl.BlockSpec((1, n), lambda: (0, 0)),
            pl.BlockSpec((kp, f), lambda: (0, 0)),
        ),
        scratch_shapes=[
            pltpu.VMEM((1, 1), jnp.float32),   # previous potential
            pltpu.VMEM((1, 1), jnp.int32),     # converged flag
        ],
        compiler_params=pltpu.CompilerParams(vmem_limit_bytes=32 * 1024 * 1024),
        cost_estimate=cost,
    )(x, c0)

    return ixs_1n[0], c_out[:n_clusters]


if __name__ == "__main__":
    key = jax.random.PRNGKey(0)
    k_data, k_init = jax.random.split(key)

    n_samples, n_features, n_clusters = 64, 32, 5
    x = jax.random.normal(k_data, (n_samples, n_features), dtype=jnp.float32)

    cluster_ixs, cluster_centers = kmeans_forward(
        x, k_init, n_clusters=n_clusters, max_iter=30, tol=1e-5
    )
    jax.block_until_ready((cluster_ixs, cluster_centers))

    assert cluster_ixs.shape == (n_samples,)
    assert cluster_centers.shape == (n_clusters, n_features)
    assert bool(jnp.all((cluster_ixs >= 0) & (cluster_ixs < n_clusters)))

    print("KERNEL_OK")
</pallas_src>

<mosaic_0001>
module attributes {stable_mosaic.version = 11 : i64} {
  func.func @_kmeans_kernel(%arg0: memref<64x32xf32, #tpu.memory_space<vmem>>, %arg1: memref<8x32xf32, #tpu.memory_space<vmem>>, %arg2: memref<1x64xi32, #tpu.memory_space<vmem>>, %arg3: memref<8x32xf32, #tpu.memory_space<vmem>>, %arg4: memref<1x1xf32, #tpu.memory_space<vmem>>, %arg5: memref<1x1xi32, #tpu.memory_space<vmem>>) attributes {dimension_semantics = [], scalar_prefetch = 0 : i64, scratch_operands = 2 : i64, tpu.core_type = #tpu.core_type<tc>} {
    %c0 = arith.constant 0 : index
    %c0_0 = arith.constant 0 : index
    %0 = vector.load %arg0[%c0, %c0_0] : memref<64x32xf32, #tpu.memory_space<vmem>>, vector<64x32xf32>
    %cst = arith.constant 1.000000e+00 : f32
    %1 = vector.broadcast %cst : f32 to vector<1x32xf32>
    %2 = arith.mulf %0, %0 : vector<64x32xf32>
    %cst_1 = arith.constant dense<0.000000e+00> : vector<1x64xf32>
    %3 = tpu.matmul %1, %2, %cst_1 {dimension_numbers = #tpu.dot_dimension_numbers<[1], [1], [0], [0], [0, 0, 1, 0], [], []>} : vector<1x32xf32>, vector<64x32xf32>, vector<1x64xf32> -> vector<1x64xf32>
    %4 = tpu.iota {dimensions = array<i32: 0>} : vector<8x64xi32>
    %c5_i32 = arith.constant 5 : i32
    %5 = vector.broadcast %c5_i32 : i32 to vector<8x64xi32>
    %6 = arith.cmpi slt, %4, %5 : vector<8x64xi32>
    %c0_2 = arith.constant 0 : index
    %c0_3 = arith.constant 0 : index
    %7 = vector.load %arg1[%c0_2, %c0_3] : memref<8x32xf32, #tpu.memory_space<vmem>>, vector<8x32xf32>
    %c0_4 = arith.constant 0 : index
    %c0_5 = arith.constant 0 : index
    %8 = vector.load %arg3[%c0_4, %c0_5] : memref<8x32xf32, #tpu.memory_space<vmem>>, vector<8x32xf32>
    tpu.vector_store %arg3[%c0_4, %c0_5], %7 {strides = array<i32>} : memref<8x32xf32, #tpu.memory_space<vmem>>, vector<8x32xf32>,
    %cst_6 = arith.constant 0x7F800000 : f32
    %9 = vector.broadcast %cst_6 : f32 to vector<1x1xf32>
    %c0_7 = arith.constant 0 : index
    %c0_8 = arith.constant 0 : index
    %10 = vector.load %arg4[%c0_7, %c0_8] : memref<1x1xf32, #tpu.memory_space<vmem>>, vector<1x1xf32>
    tpu.vector_store %arg4[%c0_7, %c0_8], %9 {strides = array<i32>} : memref<1x1xf32, #tpu.memory_space<vmem>>, vector<1x1xf32>,
    %c0_i32 = arith.constant 0 : i32
    %11 = vector.broadcast %c0_i32 : i32 to vector<1x1xi32>
    %c0_9 = arith.constant 0 : index
    %c0_10 = arith.constant 0 : index
    %12 = vector.load %arg5[%c0_9, %c0_10] : memref<1x1xi32, #tpu.memory_space<vmem>>, vector<1x1xi32>
    tpu.vector_store %arg5[%c0_9, %c0_10], %11 {strides = array<i32>} : memref<1x1xi32, #tpu.memory_space<vmem>>, vector<1x1xi32>,
    %c0_i32_11 = arith.constant 0 : i32
    %c30_i32 = arith.constant 30 : i32
    %13 = arith.addi %c0_i32_11, %c30_i32 : i32
    %c1_i32 = arith.constant 1 : i32
    scf.for %arg6 = %c0_i32_11 to %13 step %c1_i32  : i32 {
      %c0_12 = arith.constant 0 : index
      %c0_13 = arith.constant 0 : index
      %14 = vector.load %arg5[%c0_12, %c0_13] : memref<1x1xi32, #tpu.memory_space<vmem>>, vector<1x1xi32>
      %15 = vector.extract %14[0, 0] : i32 from vector<1x1xi32>
      %c0_i32_14 = arith.constant 0 : i32
      %16 = arith.cmpi eq, %15, %c0_i32_14 : i32
      %17 = arith.extui %16 : i1 to i32
      %c0_i32_15 = arith.constant 0 : i32
      %18 = arith.cmpi ne, %17, %c0_i32_15 : i32
      scf.if %18 {
        %c0_16 = arith.constant 0 : index
        %c0_17 = arith.constant 0 : index
        %19 = vector.load %arg3[%c0_16, %c0_17] : memref<8x32xf32, #tpu.memory_space<vmem>>, vector<8x32xf32>
        %cst_18 = arith.constant dense<0.000000e+00> : vector<8x64xf32>
        %20 = tpu.matmul %19, %0, %cst_18 {dimension_numbers = #tpu.dot_dimension_numbers<[1], [1], [0], [0], [0, 0, 1, 0], [], []>} : vector<8x32xf32>, vector<64x32xf32>, vector<8x64xf32> -> vector<8x64xf32>
        %21 = arith.mulf %19, %19 : vector<8x32xf32>
        %cst_19 = arith.constant dense<0.000000e+00> : vector<8xf32>
        %22 = vector.multi_reduction <add>, %21, %cst_19 [1] : vector<8x32xf32> to vector<8xf32>
        %23 = vector.shape_cast %22 : vector<8xf32> to vector<8x1xf32>
        %24 = vector.broadcast %23 : vector<8x1xf32> to vector<8x64xf32>
        %25 = vector.broadcast %3 : vector<1x64xf32> to vector<8x64xf32>
        %26 = arith.addf %24, %25 : vector<8x64xf32>
        %cst_20 = arith.constant 2.000000e+00 : f32
        %27 = vector.broadcast %cst_20 : f32 to vector<8x64xf32>
        %28 = arith.mulf %27, %20 : vector<8x64xf32>
        %29 = arith.subf %26, %28 : vector<8x64xf32>
        %cst_21 = arith.constant 0.000000e+00 : f32
        %30 = vector.broadcast %cst_21 : f32 to vector<8x64xf32>
        %31 = arith.maximumf %29, %30 : vector<8x64xf32>
        %32 = arith.cmpf one, %31, %31 : vector<8x64xf32>
        %cst_22 = arith.constant dense<true> : vector<8x64xi1>
        %33 = arith.xori %32, %cst_22 : vector<8x64xi1>
        %34 = arith.andi %6, %33 : vector<8x64xi1>
        %cst_23 = arith.constant 0x7F800000 : f32
        %35 = vector.broadcast %cst_23 : f32 to vector<8x64xf32>
        %36 = arith.select %34, %31, %35 : vector<8x64xi1>, vector<8x64xf32>
        %cst_24 = arith.constant dense<0x7F800000> : vector<64xf32>
        %37 = vector.multi_reduction <minimumf>, %36, %cst_24 [0] : vector<8x64xf32> to vector<64xf32>
        %38 = vector.shape_cast %37 : vector<64xf32> to vector<1x64xf32>
        %39 = vector.broadcast %38 : vector<1x64xf32> to vector<8x64xf32>
        %40 = arith.cmpf oeq, %36, %39 : vector<8x64xf32>
        %c8_i32 = arith.constant 8 : i32
        %41 = vector.broadcast %c8_i32 : i32 to vector<8x64xi32>
        %42 = arith.select %40, %4, %41 : vector<8x64xi1>, vector<8x64xi32>
        %cst_25 = arith.constant dense<2147483647> : vector<64xi32>
        %43 = vector.multi_reduction <minsi>, %42, %cst_25 [0] : vector<8x64xi32> to vector<64xi32>
        %44 = vector.shape_cast %43 : vector<64xi32> to vector<1x64xi32>
        %c0_26 = arith.constant 0 : index
        %c0_27 = arith.constant 0 : index
        %45 = vector.load %arg2[%c0_26, %c0_27] : memref<1x64xi32, #tpu.memory_space<vmem>>, vector<1x64xi32>
        tpu.vector_store %arg2[%c0_26, %c0_27], %44 {strides = array<i32>} : memref<1x64xi32, #tpu.memory_space<vmem>>, vector<1x64xi32>,
        %46 = vector.broadcast %44 : vector<1x64xi32> to vector<8x64xi32>
        %47 = arith.cmpi eq, %4, %46 : vector<8x64xi32>
        %48 = arith.extui %47 : vector<8x64xi1> to vector<8x64xi32>
        %49 = arith.sitofp %48 : vector<8x64xi32> to vector<8x64xf32>
        %cst_28 = arith.constant dense<0.000000e+00> : vector<8x32xf32>
        %50 = tpu.matmul %49, %0, %cst_28 {dimension_numbers = #tpu.dot_dimension_numbers<[1], [0], [0], [1], [0, 0, 1, 1], [], []>} : vector<8x64xf32>, vector<64x32xf32>, vector<8x32xf32> -> vector<8x32xf32>
        %cst_29 = arith.constant dense<0.000000e+00> : vector<8xf32>
        %51 = vector.multi_reduction <add>, %49, %cst_29 [1] : vector<8x64xf32> to vector<8xf32>
        %52 = vector.shape_cast %51 : vector<8xf32> to vector<8x1xf32>
        %53 = tpu.reciprocal %52 {approx = true} : vector<8x1xf32> -> vector<8x1xf32>
        %54 = vector.broadcast %53 : vector<8x1xf32> to vector<8x32xf32>
        %55 = arith.mulf %50, %54 : vector<8x32xf32>
        %c0_30 = arith.constant 0 : index
        %c0_31 = arith.constant 0 : index
        %56 = vector.load %arg3[%c0_30, %c0_31] : memref<8x32xf32, #tpu.memory_space<vmem>>, vector<8x32xf32>
        tpu.vector_store %arg3[%c0_30, %c0_31], %55 {strides = array<i32>} : memref<8x32xf32, #tpu.memory_space<vmem>>, vector<8x32xf32>,
        %cst_32 = arith.constant dense<0.000000e+00> : vector<1xf32>
        %57 = vector.multi_reduction <add>, %38, %cst_32 [1] : vector<1x64xf32> to vector<1xf32>
        %58 = vector.shape_cast %57 : vector<1xf32> to vector<1x1xf32>
        %c0_33 = arith.constant 0 : index
        %c0_34 = arith.constant 0 : index
        %59 = vector.load %arg4[%c0_33, %c0_34] : memref<1x1xf32, #tpu.memory_space<vmem>>, vector<1x1xf32>
        %60 = arith.subf %58, %59 : vector<1x1xf32>
        %61 = math.absf %60 : vector<1x1xf32>
        %cst_35 = arith.constant 9.99999974E-6 : f32
        %62 = vector.broadcast %cst_35 : f32 to vector<1x1xf32>
        %63 = arith.cmpf olt, %61, %62 : vector<1x1xf32>
        %64 = arith.extui %63 : vector<1x1xi1> to vector<1x1xi32>
        %c0_36 = arith.constant 0 : index
        %c0_37 = arith.constant 0 : index
        %65 = vector.load %arg5[%c0_36, %c0_37] : memref<1x1xi32, #tpu.memory_space<vmem>>, vector<1x1xi32>
        tpu.vector_store %arg5[%c0_36, %c0_37], %64 {strides = array<i32>} : memref<1x1xi32, #tpu.memory_space<vmem>>, vector<1x1xi32>,
        %c0_38 = arith.constant 0 : index
        %c0_39 = arith.constant 0 : index
        %66 = vector.load %arg4[%c0_38, %c0_39] : memref<1x1xf32, #tpu.memory_space<vmem>>, vector<1x1xf32>
        tpu.vector_store %arg4[%c0_38, %c0_39], %58 {strides = array<i32>} : memref<1x1xf32, #tpu.memory_space<vmem>>, vector<1x1xf32>,
      } else {
      }
    }
    return
  }
}

</mosaic_0001>

<llo_original>
// kernel: kmeans_forward.1
$region0: #{kmeans_forward.1}
  #allocation0 [shape = 'u32[]', space=smem, size = 0x4, offset = 0x4, fixed_abs, tag = 'smem constant byte address 0x4 - core index']
  #allocation1 [shape = 'u32[144,128]{1,0:T(1,128)}', space=vmem, size = 0x12000, scoped, tag = 'internal scratch']
  #allocation2 [shape = 'f32[1,1]{1,0:T(1,128)}', space=vmem, size = 0x200, scoped, tag = 'scratch operand']
  #allocation3 [shape = 's32[1,1]{1,0:T(1,128)}', space=vmem, size = 0x200, scoped, tag = 'scratch operand']
  %s0 = inlined_call_operand.vmem [shape: f32[64,32], index: 0, kind: input, shape index: {}]
  %s1 = inlined_call_operand.vmem [shape: f32[8,32], index: 1, kind: input, shape index: {}]
  %s2 = inlined_call_operand.hbm [shape: s32[1,64], index: 2, kind: output, shape index: {0}]
  %s3 = inlined_call_operand.hbm [shape: f32[8,32], index: 3, kind: output, shape index: {1}]
  %4 = xla_tuple %s2, %s3
  %s5 = sld [smem:[#allocation0]]
  $region37: #{kmeans_forward.1} parent=0
    _
  %s7 = ssub.s32 1, %s5
  %s8 = scalar_select 0, %s7, %s5
  $region1: #{kmeans_forward.1} parent=0
    #allocation4 [shape = 'u8[512]{0}', space=vmem, size = 0x400, scoped, tag = 'output window, operand 0, single buffered']
    #allocation5 [shape = 's32[1]{0}', space=sflag, size = 0x4, scoped, tag = 'scoped memory for kmeans_forward.1']
    #allocation6 [shape = 'u8[4096]{0}', space=vmem, size = 0x1000, scoped, tag = 'output window, operand 1, single buffered']
    #allocation7 [shape = 's32[1]{0}', space=sflag, size = 0x4, scoped, tag = 'scoped memory for kmeans_forward.1']
    %9 = vsyncpa [#allocation5], 0
    %10 = vsyncpa [#allocation7], 0
    // Predicated region
    $region2: #{kmeans_forward.1} parent=1 // pred_check
      _
    $region3: #{kmeans_forward.1} parent=1 // pred_check_branch
      %12 = sbr.rel (0) target = $region5
    $region4: #{kmeans_forward.1} parent=1 // pred_region
      _
    $region5: #{kmeans_forward.1} parent=1 // pred_fallthru
      _
    // Predicated region
    $region6: #{kmeans_forward.1} parent=1 // pred_check
      _
    $region7: #{kmeans_forward.1} parent=1 // pred_check_branch
      %14 = sbr.rel (0) target = $region9
    $region8: #{kmeans_forward.1} parent=1 // pred_region
      _
    $region9: #{kmeans_forward.1} parent=1 // pred_fallthru
      _
    %v15 = vld [vmem:[%s0] sm:$0xff]
    %v16 = vld [vmem:[%s0 + $0x8] sm:$0xff]
    %v17 = vld [vmem:[%s0 + $0x10] sm:$0xff]
    %v18 = vld [vmem:[%s0 + $0x18] sm:$0xff]
    %v19 = vld [vmem:[%s0 + $0x20] sm:$0xff]
    %v20 = vld [vmem:[%s0 + $0x28] sm:$0xff]
    %v21 = vld [vmem:[%s0 + $0x30] sm:$0xff]
    %v22 = vld [vmem:[%s0 + $0x38] sm:$0xff]
    %v23 = vmul.f32 %v15, %v15
    %v24 = vmul.f32 %v16, %v16
    %v25 = vmul.f32 %v17, %v17
    %v26 = vmul.f32 %v18, %v18
    %v27 = vmul.f32 %v19, %v19
    %v28 = vmul.f32 %v20, %v20
    %v29 = vmul.f32 %v21, %v21
    %v30 = vmul.f32 %v22, %v22
    %vm31 = vcmask 261120
    %v33 = vsel %vm31, 1.0, 0
    %v36 = vsel %vm31, %v23, 0
    %v39 = vsel %vm31, %v24, 0
    %v42 = vsel %vm31, %v25, 0
    %v45 = vsel %vm31, %v26, 0
    %v48 = vsel %vm31, %v27, 0
    %v51 = vsel %vm31, %v28, 0
    %v54 = vsel %vm31, %v29, 0
    %v57 = vsel %vm31, %v30, 0
    %59 = vmatprep.subr.mxu0 0.0
    %60 = vmatpush1.xpose.msra.mxu0 0.0
    %61 = vmatprep.subr.mxu0 0.0
    %62 = vmatpush1.xpose.msra.mxu0 0.0
    %63 = vmatprep.subr.mxu0 0.0
    %64 = vmatpush1.xpose.msra.mxu0 0.0
    %65 = vmatprep.subr.mxu0 0.0
    %66 = vmatpush1.xpose.msra.mxu0 0.0
    %67 = vmatprep.subr.mxu0 0.0
    %68 = vmatpush1.xpose.msra.mxu0 0.0
    %69 = vmatprep.subr.mxu0 0.0
    %70 = vmatpush1.xpose.msra.mxu0 0.0
    %71 = vmatprep.subr.mxu0 0.0
    %72 = vmatpush1.xpose.msra.mxu0 0.0
    %73 = vmatprep.subr.mxu0 0.0
    %74 = vmatpush1.xpose.msra.mxu0 0.0
    %75 = vmatprep.subr.mxu0 0.0
    %76 = vmatpush1.xpose.msra.mxu0 %v57
    %77 = vmatprep.subr.mxu0 0.0
    %78 = vmatpush1.xpose.msra.mxu0 %v54
    %79 = vmatprep.subr.mxu0 0.0
    %80 = vmatpush1.xpose.msra.mxu0 %v51
    %81 = vmatprep.subr.mxu0 0.0
    %82 = vmatpush1.xpose.msra.mxu0 %v48
    %83 = vmatprep.subr.mxu0 0.0
    %84 = vmatpush1.xpose.msra.mxu0 %v45
    %85 = vmatprep.subr.mxu0 0.0
    %86 = vmatpush1.xpose.msra.mxu0 %v42
    %87 = vmatprep.subr.mxu0 0.0
    %88 = vmatpush1.xpose.msra.mxu0 %v39
    %89 = vmatprep.subr.mxu0 0.0
    %90 = vmatpush1.xpose.msra.mxu0 %v36
    %91 = vmatprep.subr.mxu0 0.0
    %92 = vmatpush2.xpose.msra.mxu0 0.0
    %93 = vmatprep.subr.mxu0 0.0
    %94 = vmatpush2.xpose.msra.mxu0 0.0
    %95 = vmatprep.subr.mxu0 0.0
    %96 = vmatpush2.xpose.msra.mxu0 0.0
    %97 = vmatprep.subr.mxu0 0.0
    %98 = vmatpush2.xpose.msra.mxu0 0.0
    %99 = vmatprep.subr.mxu0 0.0
    %100 = vmatpush2.xpose.msra.mxu0 0.0
    %101 = vmatprep.subr.mxu0 0.0
    %102 = vmatpush2.xpose.msra.mxu0 0.0
    %103 = vmatprep.subr.mxu0 0.0
    %104 = vmatpush2.xpose.msra.mxu0 0.0
    %105 = vmatprep.subr.mxu0 0.0
    %106 = vmatpush2.xpose.msra.mxu0 0.0
    %107 = vmatprep.subr.mxu0 0.0
    %108 = vmatpush2.xpose.msra.mxu0 0.0
    %109 = vmatprep.subr.mxu0 0.0
    %110 = vmatpush2.xpose.msra.mxu0 0.0
    %111 = vmatprep.subr.mxu0 0.0
    %112 = vmatpush2.xpose.msra.mxu0 0.0
    %113 = vmatprep.subr.mxu0 0.0
    %114 = vmatpush2.xpose.msra.mxu0 0.0
    %115 = vmatprep.subr.mxu0 0.0
    %116 = vmatpush2.xpose.msra.mxu0 0.0
    %117 = vmatprep.subr.mxu0 0.0
    %118 = vmatpush2.xpose.msra.mxu0 0.0
    %119 = vmatprep.subr.mxu0 0.0
    %120 = vmatpush2.xpose.msra.mxu0 0.0
    %121 = vmatprep.subr.mxu0 0.0
    %122 = vmatpush2.xpose.msra.mxu0 0.0
    %123 = vmatprep.mubr.f32.mxu0 0.0
    %124 = vmatmul.mubr.f32.gmra.mxu0 %v33
    %v125 = vpop.f32.mrf.mxu0
    %v126 = vadd.f32 0.0, %v125
    %v127 = vpop.f32.mrf.mxu0
    %128 = vdwg.mxu0
    %v129 = vlaneseq
    %v130 = vshrl.u32 %v129, 7
    %vm131 = vcmp.lt.s32.totalorder %v130, 5
    %v132 = vld [vmem:[%s1] sm:$0xff]
    %133 = vst.msk [vmem:[#allocation6] sm:$0xff] %vm31, %v132
    %vm134 = vcmask 0
    %135 = vst.msk [vmem:[#allocation2] sm:$0x1] %vm134, inf
    %136 = vst.msk [vmem:[#allocation3] sm:$0x1] %vm134, 0
    loop: start=0, step=1, limit=30
    $region10: #{kmeans_forward.1} parent=1 // loop_pre_header
      _
    $region11: #{kmeans_forward.1} parent=1 // loop_header
      %s138 = sphi 0, %s142
      %p139 = scmp.ge.s32.totalorder %s138, 30
    $region12: #{kmeans_forward.1} parent=1 // loop_header_branch
      %141 = sbr.rel (%p139) target = $region16
    $region13: #{kmeans_forward.1} parent=1 // loop_body
      %v143 = vld [vmem:[#allocation3] sm:$0x1]
      %s144 = vtos %v143
      %p145 = scmp.eq.s32.totalorder %s144, 0
      // Predicated region
      $region17: #{kmeans_forward.1} parent=13 // pred_check
        %p146 = pneg %p145
      $region18: #{kmeans_forward.1} parent=13 // pred_check_branch
        %148 = sbr.rel (%p146) target = $region20
      $region19: #{kmeans_forward.1} parent=13 // pred_region
        %v149 = vld [vmem:[#allocation6] sm:$0xff]
        %v151 = vsel %vm31, %v149, 0
        %v154 = vsel %vm31, %v15, 0
        %v157 = vsel %vm31, %v16, 0
        %v160 = vsel %vm31, %v17, 0
        %v163 = vsel %vm31, %v18, 0
        %v166 = vsel %vm31, %v19, 0
        %v169 = vsel %vm31, %v20, 0
        %v172 = vsel %vm31, %v21, 0
        %v175 = vsel %vm31, %v22, 0
        %177 = vmatprep.subr.mxu0 0.0
        %178 = vmatpush1.xpose.msra.mxu0 0.0
        %179 = vmatprep.subr.mxu0 0.0
        %180 = vmatpush1.xpose.msra.mxu0 0.0
        %181 = vmatprep.subr.mxu0 0.0
        %182 = vmatpush1.xpose.msra.mxu0 0.0
        %183 = vmatprep.subr.mxu0 0.0
        %184 = vmatpush1.xpose.msra.mxu0 0.0
        %185 = vmatprep.subr.mxu0 0.0
        %186 = vmatpush1.xpose.msra.mxu0 0.0
        %187 = vmatprep.subr.mxu0 0.0
        %188 = vmatpush1.xpose.msra.mxu0 0.0
        %189 = vmatprep.subr.mxu0 0.0
        %190 = vmatpush1.xpose.msra.mxu0 0.0
        %191 = vmatprep.subr.mxu0 0.0
        %192 = vmatpush1.xpose.msra.mxu0 0.0
        %193 = vmatprep.subr.mxu0 0.0
        %194 = vmatpush1.xpose.msra.mxu0 %v175
        %195 = vmatprep.subr.mxu0 0.0
        %196 = vmatpush1.xpose.msra.mxu0 %v172
        %197 = vmatprep.subr.mxu0 0.0
        %198 = vmatpush1.xpose.msra.mxu0 %v169
        %199 = vmatprep.subr.mxu0 0.0
        %200 = vmatpush1.xpose.msra.mxu0 %v166
        %201 = vmatprep.subr.mxu0 0.0
        %202 = vmatpush1.xpose.msra.mxu0 %v163
        %203 = vmatprep.subr.mxu0 0.0
        %204 = vmatpush1.xpose.msra.mxu0 %v160
        %205 = vmatprep.subr.mxu0 0.0
        %206 = vmatpush1.xpose.msra.mxu0 %v157
        %207 = vmatprep.subr.mxu0 0.0
        %208 = vmatpush1.xpose.msra.mxu0 %v154
        %209 = vmatprep.subr.mxu0 0.0
        %210 = vmatpush2.xpose.msra.mxu0 0.0
        %211 = vmatprep.subr.mxu0 0.0
        %212 = vmatpush2.xpose.msra.mxu0 0.0
        %213 = vmatprep.subr.mxu0 0.0
        %214 = vmatpush2.xpose.msra.mxu0 0.0
        %215 = vmatprep.subr.mxu0 0.0
        %216 = vmatpush2.xpose.msra.mxu0 0.0
        %217 = vmatprep.subr.mxu0 0.0
        %218 = vmatpush2.xpose.msra.mxu0 0.0
        %219 = vmatprep.subr.mxu0 0.0
        %220 = vmatpush2.xpose.msra.mxu0 0.0
        %221 = vmatprep.subr.mxu0 0.0
        %222 = vmatpush2.xpose.msra.mxu0 0.0
        %223 = vmatprep.subr.mxu0 0.0
        %224 = vmatpush2.xpose.msra.mxu0 0.0
        %225 = vmatprep.subr.mxu0 0.0
        %226 = vmatpush2.xpose.msra.mxu0 0.0
        %227 = vmatprep.subr.mxu0 0.0
        %228 = vmatpush2.xpose.msra.mxu0 0.0
        %229 = vmatprep.subr.mxu0 0.0
        %230 = vmatpush2.xpose.msra.mxu0 0.0
        %231 = vmatprep.subr.mxu0 0.0
        %232 = vmatpush2.xpose.msra.mxu0 0.0
        %233 = vmatprep.subr.mxu0 0.0
        %234 = vmatpush2.xpose.msra.mxu0 0.0
        %235 = vmatprep.subr.mxu0 0.0
        %236 = vmatpush2.xpose.msra.mxu0 0.0
        %237 = vmatprep.subr.mxu0 0.0
        %238 = vmatpush2.xpose.msra.mxu0 0.0
        %239 = vmatprep.subr.mxu0 0.0
        %240 = vmatpush2.xpose.msra.mxu0 0.0
        %241 = vmatprep.mubr.f32.mxu0 0.0
        %242 = vmatmul.mubr.f32.gmra.mxu0 %v151
        %v243 = vpop.f32.mrf.mxu0
        %v244 = vadd.f32 0.0, %v243
        %v245 = vpop.f32.mrf.mxu0
        %246 = vdwg.mxu0
        %v247 = vmul.f32 %v149, %v149
        %v248 = vsel %vm31, %v247, 0.0
        %249 = vadd.xlane.f32.xlu0 %v248
        %v250 = vpop.xlane.xlu0 %249
        %v251 = vlaneseq
        %v252 = vshrl.u32 %v251, 7
        %v253 = vsub.s32 0, %v252
        %v254 = vrot.slane %v126, %v253
        %v255 = vadd.f32 %v250, %v254
        %v256 = vmul.f32 %v244, 2.0
        %v257 = vsub.f32 %v255, %v256
        %v258 = vmax.f32 %v257, 0.0
        %vm259 = vcmp.ne.f32.partialorder %v258, %v258
        %vm260 = vmxor %vm259, 1
        %vm261 = vmand %vm131, %vm260
        %v262 = vsel %vm261, %v258, inf
        %vm263 = vcmask 523264
        %v264 = vsel %vm263, %v262, inf
        %v265 = vrot.slane %v264, 4
        %v266 = vmin.f32 %v264, %v265
        %v267 = vrot.slane %v266, 2
        %v268 = vmin.f32 %v266, %v267
        %v269 = vrot.slane %v268, 1
        %v270 = vmin.f32 %v268, %v269
        %vm271 = vcmp.eq.f32.partialorder %v262, %v270
        %v272 = vsel %vm271, %v130, 8
        %v273 = vsel %vm263, %v272, 2147483647
        %v274 = vrot.slane %v273, 4
        %vm275 = vcmp.lt.s32.totalorder %v273, %v274
        %v276 = vsel %vm275, %v273, %v274
        %v277 = vrot.slane %v276, 2
        %vm278 = vcmp.lt.s32.totalorder %v276, %v277
        %v279 = vsel %vm278, %v276, %v277
        %v280 = vrot.slane %v279, 1
        %vm281 = vcmp.lt.s32.totalorder %v279, %v280
        %v282 = vsel %vm281, %v279, %v280
        %vm283 = vcmask 516096
        %284 = vst.msk [vmem:[#allocation4] sm:$0x1] %vm283, %v282
        %vm285 = vcmp.eq.s32.totalorder %v130, %v282
        %v286 = vsel %vm285, 1, 0
        %v287 = vcvt.s32.f32 %v286
        %v289 = vsel %vm263, %v287, 0
        %291 = vmatprep.subr.mxu0 0.0
        %292 = vmatpush1.msra.mxu0 0.0
        %293 = vmatprep.subr.mxu0 0.0
        %294 = vmatpush1.msra.mxu0 0.0
        %295 = vmatprep.subr.mxu0 0.0
        %296 = vmatpush1.msra.mxu0 0.0
        %297 = vmatprep.subr.mxu0 0.0
        %298 = vmatpush1.msra.mxu0 0.0
        %299 = vmatprep.subr.mxu0 0.0
        %300 = vmatpush1.msra.mxu0 0.0
        %301 = vmatprep.subr.mxu0 0.0
        %302 = vmatpush1.msra.mxu0 0.0
        %303 = vmatprep.subr.mxu0 0.0
        %304 = vmatpush1.msra.mxu0 0.0
        %305 = vmatprep.subr.mxu0 0.0
        %306 = vmatpush1.msra.mxu0 0.0
        %307 = vmatprep.subr.mxu0 0.0
        %308 = vmatpush1.msra.mxu0 %v22
        %309 = vmatprep.subr.mxu0 0.0
        %310 = vmatpush1.msra.mxu0 %v21
        %311 = vmatprep.subr.mxu0 0.0
        %312 = vmatpush1.msra.mxu0 %v20
        %313 = vmatprep.subr.mxu0 0.0
        %314 = vmatpush1.msra.mxu0 %v19
        %315 = vmatprep.subr.mxu0 0.0
        %316 = vmatpush1.msra.mxu0 %v18
        %317 = vmatprep.subr.mxu0 0.0
        %318 = vmatpush1.msra.mxu0 %v17
        %319 = vmatprep.subr.mxu0 0.0
        %320 = vmatpush1.msra.mxu0 %v16
        %321 = vmatprep.subr.mxu0 0.0
        %322 = vmatpush1.msra.mxu0 %v15
        %323 = vmatprep.subr.mxu0 0.0
        %324 = vmatpush2.msra.mxu0 0.0
        %325 = vmatprep.subr.mxu0 0.0
        %326 = vmatpush2.msra.mxu0 0.0
        %327 = vmatprep.subr.mxu0 0.0
        %328 = vmatpush2.msra.mxu0 0.0
        %329 = vmatprep.subr.mxu0 0.0
        %330 = vmatpush2.msra.mxu0 0.0
        %331 = vmatprep.subr.mxu0 0.0
        %332 = vmatpush2.msra.mxu0 0.0
        %333 = vmatprep.subr.mxu0 0.0
        %334 = vmatpush2.msra.mxu0 0.0
        %335 = vmatprep.subr.mxu0 0.0
        %336 = vmatpush2.msra.mxu0 0.0
        %337 = vmatprep.subr.mxu0 0.0
        %338 = vmatpush2.msra.mxu0 0.0
        %339 = vmatprep.subr.mxu0 0.0
        %340 = vmatpush2.msra.mxu0 0.0
        %341 = vmatprep.subr.mxu0 0.0
        %342 = vmatpush2.msra.mxu0 0.0
        %343 = vmatprep.subr.mxu0 0.0
        %344 = vmatpush2.msra.mxu0 0.0
        %345 = vmatprep.subr.mxu0 0.0
        %346 = vmatpush2.msra.mxu0 0.0
        %347 = vmatprep.subr.mxu0 0.0
        %348 = vmatpush2.msra.mxu0 0.0
        %349 = vmatprep.subr.mxu0 0.0
        %350 = vmatpush2.msra.mxu0 0.0
        %351 = vmatprep.subr.mxu0 0.0
        %352 = vmatpush2.msra.mxu0 0.0
        %353 = vmatprep.subr.mxu0 0.0
        %354 = vmatpush2.msra.mxu0 0.0
        %355 = vmatprep.mubr.f32.mxu0 0.0
        %356 = vmatmul.mubr.f32.gmra.mxu0 %v289
        %v357 = vpop.f32.mrf.mxu0
        %v358 = vadd.f32 0.0, %v357
        %v359 = vpop.f32.mrf.mxu0
        %360 = vdwg.mxu0
        %v361 = vsel %vm263, %v287, 0.0
        %362 = vadd.xlane.f32.xlu0 %v361
        %v363 = vpop.xlane.xlu0 %362
        %v364 = vrcp.pop %v363
        %v365 = vmul.f32 %v358, %v364
        %366 = vst.msk [vmem:[#allocation6] sm:$0xff] %vm31, %v365
        %v367 = vsel %vm263, %v270, 0.0
        %368 = vadd.xlane.f32.xlu0 %v367
        %v369 = vpop.xlane.xlu0 %368
        %v370 = vld [vmem:[#allocation2] sm:$0x1]
        %v371 = vsub.f32 %v369, %v370
        %v372 = vand.u32 2147483647, %v371
        %vm373 = vcmp.lt.f32.partialorder %v372, 1e-05
        %v374 = vsel %vm373, 1, 0
        %375 = vst.msk [vmem:[#allocation3] sm:$0x1] %vm134, %v374
        %376 = vst.msk [vmem:[#allocation2] sm:$0x1] %vm134, %v369
      $region20: #{kmeans_forward.1} parent=13 // pred_fallthru
        _
    $region14: #{kmeans_forward.1} parent=1 // loop_footer
      %s142 = sadd.s32 1, %s138
    $region15: #{kmeans_forward.1} parent=1 // loop_footer_branch
      %137 = sbr.rel target = $region11
    $region16: #{kmeans_forward.1} parent=1 // loop_exit
      _
    // Predicated region
    $region21: #{kmeans_forward.1} parent=1 // pred_check
      _
    $region22: #{kmeans_forward.1} parent=1 // pred_check_branch
      %378 = sbr.rel (0) target = $region24
    $region23: #{kmeans_forward.1} parent=1 // pred_region
      %s380 = ssub.s32 16, 16
      %381 = vsyncadd [#allocation5], %s380
      %s383 = sshll.u32 [#allocation4], 4
      %s384 = int_to_ptr.vmem [resolvable:$true] %s383
      %386 = dma.vmem_to_hbm [thread:$0]  %s384, 16, %s2, [#allocation5]
    $region24: #{kmeans_forward.1} parent=1 // pred_fallthru
      _
    // Predicated region
    $region25: #{kmeans_forward.1} parent=1 // pred_check
      _
    $region26: #{kmeans_forward.1} parent=1 // pred_check_branch
      %388 = sbr.rel (0) target = $region28
    $region27: #{kmeans_forward.1} parent=1 // pred_region
      %s390 = ssub.s32 128, 128
      %391 = vsyncadd [#allocation7], %s390
      %s393 = sshll.u32 [#allocation6], 4
      %s394 = int_to_ptr.vmem [resolvable:$true] %s393
      %396 = dma.vmem_to_hbm [thread:$0]  %s394, 128, %s3, [#allocation7]
    $region28: #{kmeans_forward.1} parent=1 // pred_fallthru
      _
    // Predicated region
    $region29: #{kmeans_forward.1} parent=1 // pred_check
      _
    $region30: #{kmeans_forward.1} parent=1 // pred_check_branch
      %398 = sbr.rel (0) target = $region32
    $region31: #{kmeans_forward.1} parent=1 // pred_region
      %399 = dma.done [#allocation5], 16
    $region32: #{kmeans_forward.1} parent=1 // pred_fallthru
      _
    // Predicated region
    $region33: #{kmeans_forward.1} parent=1 // pred_check
      _
    $region34: #{kmeans_forward.1} parent=1 // pred_check_branch
      %401 = sbr.rel (0) target = $region36
    $region35: #{kmeans_forward.1} parent=1 // pred_region
      %402 = dma.done [#allocation7], 128
    $region36: #{kmeans_forward.1} parent=1 // pred_fallthru
      _
    %403 = vsyncpa [#allocation5], 1
    %404 = vsyncpa [#allocation7], 1

</llo_original>
